<compile_context>
chip_gen: v7x
topology: tpu7x:2x2x1
jax: 0.10.0
libtpu: 0.0.40
codegen_flags: <defaults>
</compile_context>

<pallas_src>
import functools
import math

import jax
import jax.numpy as jnp
from jax import lax
from jax.experimental import pallas as pl
from jax.experimental.pallas import tpu as pltpu

_NEG = -1e30  # finite "minus infinity": avoids inf-inf NaNs in the max/exp path

# VMEM budgets (bytes) used for tile-size selection; sum stays well under the
# 48 MiB limit we allow on v7x (64 MiB physical per TensorCore).
_K_RESIDENT_BUDGET = 16 * 1024 * 1024   # 2 x resident key buffer
_Q_TILE_BUDGET = 8 * 1024 * 1024        # 2 x double-buffered q tile
_SIM_TILE_BUDGET = 10 * 1024 * 1024     # ~4 live (tq, tk) f32 temporaries


def _round_up(x: int, m: int) -> int:
    return (x + m - 1) // m * m


def _vmem_limit_bytes() -> int:
    """~3/4 of this chip's VMEM, clamped to [32, 96] MiB (v7x-safe)."""
    cap = None
    try:
        cap = getattr(pltpu.get_tpu_info(), "vmem_capacity_bytes", None)
    except Exception:
        cap = None
    if not cap:
        return 48 * 1024 * 1024
    return int(min(96 * 1024 * 1024, max(32 * 1024 * 1024, (cap * 3) // 4)))


# ---------------------------------------------------------------------------
# Resident-K kernel: the whole (padded) key matrix lives in VMEM, grid=(nq,).
# ---------------------------------------------------------------------------
def _resident_kernel(q_ref, k_ref, lab_q_ref, lab_k_ref, mlpp_ref, cnt_ref,
                     *, inv_temperature: float, batch: int, mask_tail: bool):
    tq = q_ref.shape[0]
    bk = k_ref.shape[0]
    qi = pl.program_id(0)

    # sim = (q @ k^T) * (1/T): matmul in the embeddings' native dtype (bf16 MXU
    # path on v6e/v7x), f32 accumulation, scale applied post-matmul in f32.
    sim = lax.dot_general(q_ref[...], k_ref[...],
                          dimension_numbers=(((1,), (1,)), ((), ())),
                          preferred_element_type=jnp.float32)      # (tq, bk)
    sim = sim * inv_temperature

    row = qi * tq + lax.broadcasted_iota(jnp.int32, (tq, bk), 0)
    col = lax.broadcasted_iota(jnp.int32, (tq, bk), 1)
    keep = row != col                                   # drop the diagonal
    if mask_tail:                                       # static: only if padded
        keep = jnp.logical_and(keep, col < batch)
    pos = jnp.logical_and(keep, lab_q_ref[...] == lab_k_ref[...])

    sim_keep = jnp.where(keep, sim, _NEG)
    m = jnp.max(sim_keep, axis=1, keepdims=True)        # row-max stays on XLU
    p = jnp.exp(sim_keep - m)                           # EUP; masked cols -> 0

    # Row-sums offloaded to the (otherwise idle) MXU via dots with ones.
    ones = jnp.ones((bk, 1), jnp.float32)
    posf = pos.astype(jnp.float32)
    l = jnp.dot(p, ones, preferred_element_type=jnp.float32)            # sum exp
    s = jnp.dot(posf * sim, ones, preferred_element_type=jnp.float32)   # sum pos*sim
    c = jnp.dot(posf, ones, preferred_element_type=jnp.float32)         # sum pos

    log_z = m + jnp.log(l)                               # log sum_{j!=i} exp(sim)
    mlpp_ref[...] = (s - c * log_z) / (c + 1e-12)        # sum pos*(sim - logZ) / count
    cnt_ref[...] = c


# ---------------------------------------------------------------------------
# Tiled fallback: flash-style online logsumexp over k tiles, grid=(nq, nk).
# ---------------------------------------------------------------------------
def _tiled_kernel(q_ref, k_ref, lab_q_ref, lab_k_ref, mlpp_ref, cnt_ref,
                  m_sc, l_sc, s_sc, c_sc,
                  *, inv_temperature: float, batch: int, mask_tail: bool):
    tq = q_ref.shape[0]
    tk = k_ref.shape[0]
    qi = pl.program_id(0)
    ki = pl.program_id(1)

    @pl.when(ki == 0)
    def _():
        m_sc[...] = jnp.full_like(m_sc, _NEG)
        l_sc[...] = jnp.zeros_like(l_sc)
        s_sc[...] = jnp.zeros_like(s_sc)
        c_sc[...] = jnp.zeros_like(c_sc)

    sim = lax.dot_general(q_ref[...], k_ref[...],
                          dimension_numbers=(((1,), (1,)), ((), ())),
                          preferred_element_type=jnp.float32)       # (tq, tk)
    sim = sim * inv_temperature                                     # post-matmul

    row = qi * tq + lax.broadcasted_iota(jnp.int32, (tq, tk), 0)
    col = ki * tk + lax.broadcasted_iota(jnp.int32, (tq, tk), 1)
    keep = row != col
    if mask_tail:                                                   # static gate
        keep = jnp.logical_and(keep, col < batch)
    pos = jnp.logical_and(keep, lab_q_ref[...] == lab_k_ref[...])

    # Online, row-max-stabilised logsumexp over the kept entries.
    sim_keep = jnp.where(keep, sim, _NEG)
    m_prev = m_sc[...]
    m_new = jnp.maximum(m_prev, jnp.max(sim_keep, axis=1, keepdims=True))
    alpha = jnp.exp(m_prev - m_new)
    # Zero masked columns explicitly: fixes the all-masked-tile edge case where
    # m_new is still _NEG and exp(0)=1 would corrupt the denominator.
    p = jnp.where(keep, jnp.exp(sim_keep - m_new), 0.0)

    ones = jnp.ones((tk, 1), jnp.float32)
    posf = pos.astype(jnp.float32)
    l_sc[...] = alpha * l_sc[...] + jnp.dot(p, ones,
                                            preferred_element_type=jnp.float32)
    m_sc[...] = m_new
    s_sc[...] += jnp.dot(posf * sim, ones, preferred_element_type=jnp.float32)
    c_sc[...] += jnp.dot(posf, ones, preferred_element_type=jnp.float32)

    @pl.when(ki == pl.num_programs(1) - 1)
    def _():
        log_z = m_sc[...] + jnp.log(l_sc[...])
        cnt = c_sc[...]
        mlpp_ref[...] = (s_sc[...] - cnt * log_z) / (cnt + 1e-12)
        cnt_ref[...] = cnt


# ---------------------------------------------------------------------------
# Wrapper: tile selection, minimal padding, final scalar reduce + fallbacks.
# ---------------------------------------------------------------------------
def contrastive_loss(embeddings, labels, temperature: float = 0.05, *,
                     force_tiled: bool = False,
                     tiled_tq: int | None = None, tiled_tk: int | None = None):
    """embeddings: [B, D] float (f32 or bf16); labels: [B] int. Scalar f32 loss."""
    B, D = embeddings.shape
    if B < 2:  # static early-return, mirrors the PyTorch module
        return jnp.sum(embeddings).astype(jnp.float32) * 0.0 + jnp.float32(0.1)

    itemsize = jnp.dtype(embeddings.dtype).itemsize
    sub = 8 if itemsize >= 4 else 16          # sublane multiple (f32 / bf16)

    # ---- padding + tile selection -----------------------------------------
    bp = _round_up(B, sub)
    if bp > 256:                              # big batches: lane/tile friendly
        bp = _round_up(B, 128)

    resident = (not force_tiled) and (2 * bp * D * itemsize <= _K_RESIDENT_BUDGET)

    if resident:
        tq_max = 512
        tq_max = min(tq_max, max(sub, (_Q_TILE_BUDGET // (2 * D * itemsize)) // sub * sub))
        tq_max = min(tq_max, max(sub, (_SIM_TILE_BUDGET // (16 * bp)) // sub * sub))
        divisors = [c for c in range(sub, min(tq_max, bp) + 1, sub) if bp % c == 0]
        proper = [c for c in divisors if c < bp]   # prefer nq >= 2 (v7x megacore)
        if proper:
            tq = proper[-1]
        elif divisors:
            tq = divisors[-1]                       # single q tile (tiny batch)
        else:
            tq = max(sub, (min(tq_max, 128) // sub) * sub)
            bp = _round_up(B, tq)
        tk = bp
    else:
        tq = tiled_tq if tiled_tq is not None else min(
            256, max(sub, (_Q_TILE_BUDGET // (2 * D * itemsize)) // sub * sub))
        tk = tiled_tk if tiled_tk is not None else min(
            512, max(128, (_K_RESIDENT_BUDGET // (2 * D * itemsize)) // 128 * 128))
        bp = _round_up(B, tq * tk // math.gcd(tq, tk))
    nq, nk = bp // tq, bp // tk
    mask_tail = bp != B

    # Skip the O(B*D) pad copy entirely when the batch is already aligned.
    if mask_tail:
        emb_p = jnp.pad(embeddings, ((0, bp - B), (0, 0)))      # native dtype
        lab_p = jnp.pad(labels.astype(jnp.int32), (0, bp - B))
    else:
        emb_p = embeddings
        lab_p = labels.astype(jnp.int32)
    lab_col = lab_p.reshape(bp, 1)
    lab_row = lab_p.reshape(1, bp)

    inv_t = float(1.0 / temperature)
    vmem_lim = _vmem_limit_bytes()

    if resident:
        kernel = functools.partial(_resident_kernel, inv_temperature=inv_t,
                                   batch=B, mask_tail=mask_tail)
        mlpp, cnt = pl.pallas_call(
            kernel,
            out_shape=(jax.ShapeDtypeStruct((bp, 1), jnp.float32),
                       jax.ShapeDtypeStruct((bp, 1), jnp.float32)),
            grid_spec=pltpu.PrefetchScalarGridSpec(
                num_scalar_prefetch=0,
                grid=(nq,),
                in_specs=[
                    pl.BlockSpec((tq, D), lambda qi: (qi, 0)),   # query rows
                    pl.BlockSpec((bp, D), lambda qi: (0, 0)),    # resident keys (fetched once)
                    pl.BlockSpec((tq, 1), lambda qi: (qi, 0)),   # labels (col)
                    pl.BlockSpec((1, bp), lambda qi: (0, 0)),    # labels (row)
                ],
                out_specs=(pl.BlockSpec((tq, 1), lambda qi: (qi, 0)),
                           pl.BlockSpec((tq, 1), lambda qi: (qi, 0)))),
            compiler_params=pltpu.CompilerParams(
                dimension_semantics=("parallel",),
                vmem_limit_bytes=vmem_lim),
        )(emb_p, emb_p, lab_col, lab_row)
    else:
        kernel = functools.partial(_tiled_kernel, inv_temperature=inv_t,
                                   batch=B, mask_tail=mask_tail)
        mlpp, cnt = pl.pallas_call(
            kernel,
            out_shape=(jax.ShapeDtypeStruct((bp, 1), jnp.float32),
                       jax.ShapeDtypeStruct((bp, 1), jnp.float32)),
            grid_spec=pltpu.PrefetchScalarGridSpec(
                num_scalar_prefetch=0,
                grid=(nq, nk),
                in_specs=[
                    pl.BlockSpec((tq, D), lambda qi, ki: (qi, 0)),
                    pl.BlockSpec((tk, D), lambda qi, ki: (ki, 0)),
                    pl.BlockSpec((tq, 1), lambda qi, ki: (qi, 0)),
                    pl.BlockSpec((1, tk), lambda qi, ki: (0, ki)),
                ],
                out_specs=(pl.BlockSpec((tq, 1), lambda qi, ki: (qi, 0)),
                           pl.BlockSpec((tq, 1), lambda qi, ki: (qi, 0))),
                scratch_shapes=[pltpu.VMEM((tq, 1), jnp.float32)] * 4),
            compiler_params=pltpu.CompilerParams(
                dimension_semantics=("parallel", "arbitrary"),
                vmem_limit_bytes=vmem_lim),
        )(emb_p, emb_p, lab_col, lab_row)

    mlpp = mlpp[:B, 0]
    cnt = cnt[:B, 0]
    positive_pairs = jnp.sum(cnt)
    loss = -jnp.sum(mlpp) / B
    # Fallback is the constant 0.1 (PyTorch's `embeddings.sum()*0 + 0.1` only
    # differs when the embeddings themselves already contain NaN/inf).
    bad = jnp.logical_or(positive_pairs == 0.0,
                         jnp.logical_or(jnp.isnan(loss), jnp.isinf(loss)))
    return jnp.where(bad, jnp.float32(0.1), loss)


def _reference_loss(embeddings, labels, temperature: float = 0.05):
    """Pure-JAX reference faithful to the PyTorch forward."""
    B = embeddings.shape[0]
    e = embeddings.astype(jnp.float32)
    sim = jnp.matmul(e, e.T, precision=jax.lax.Precision.HIGHEST) / temperature
    lab = labels.reshape(-1, 1)
    mask = (lab == lab.T).astype(jnp.float32)
    positive_pairs = mask.sum() - B
    logits_mask = jnp.ones_like(mask) - jnp.eye(B, dtype=jnp.float32)
    mask = mask * logits_mask
    exp_logits = jnp.exp(sim) * logits_mask
    log_prob = sim - jnp.log(exp_logits.sum(1, keepdims=True) + 1e-12)
    mean_log_prob_pos = (mask * log_prob).sum(1) / (mask.sum(1) + 1e-12)
    loss = -mean_log_prob_pos.mean()
    bad = jnp.logical_or(positive_pairs == 0,
                         jnp.logical_or(jnp.isnan(loss), jnp.isinf(loss)))
    return jnp.where(bad, jnp.float32(0.1), loss)


if __name__ == "__main__":
    key = jax.random.PRNGKey(0)
    k1, k2, k3, k4 = jax.random.split(key, 4)

    # Case 1: tiny batch, single resident-K tile. B=8, D=32, L2-normalised
    # embeddings (usual regime for a contrastive style encoder).
    B, D = 8, 32
    emb = jax.random.normal(k1, (B, D), dtype=jnp.float32)
    emb = emb / jnp.linalg.norm(emb, axis=-1, keepdims=True)
    lab = jax.random.randint(k2, (B,), 0, 3, dtype=jnp.int32)
    out = jax.block_until_ready(contrastive_loss(emb, lab, temperature=0.05))
    ref = _reference_loss(emb, lab, temperature=0.05)
    assert jnp.allclose(out, ref, rtol=1e-2, atol=1e-2), (out, ref)

    # Case 2: resident-K path with batch padding and nq>=2 (B=200 -> bp=208, tq=104).
    B2, D2 = 200, 64
    emb2 = jax.random.normal(k3, (B2, D2), dtype=jnp.float32)
    emb2 = emb2 / jnp.linalg.norm(emb2, axis=-1, keepdims=True)
    lab2 = jax.random.randint(k4, (B2,), 0, 8, dtype=jnp.int32)
    out2 = jax.block_until_ready(contrastive_loss(emb2, lab2, temperature=0.05))
    ref2 = _reference_loss(emb2, lab2, temperature=0.05)
    assert jnp.allclose(out2, ref2, rtol=1e-2, atol=1e-2), (out2, ref2)

    # Case 3: bf16 embeddings take the bf16 MXU path (sublane-16 padding).
    out_bf16 = jax.block_until_ready(
        contrastive_loss(emb2.astype(jnp.bfloat16), lab2, temperature=0.05))
    assert bool(jnp.isfinite(out_bf16)), out_bf16
    assert jnp.allclose(out_bf16, ref2, rtol=5e-2, atol=5e-2), (out_bf16, ref2)

    # Case 4: exercise the tiled online-logsumexp fallback (multi k-tile grid).
    out_t = jax.block_until_ready(
        contrastive_loss(emb2, lab2, temperature=0.05,
                         force_tiled=True, tiled_tq=64, tiled_tk=128))
    assert jnp.allclose(out_t, ref2, rtol=1e-2, atol=1e-2), (out_t, ref2)

    print("KERNEL_OK")
</pallas_src>

<mosaic_0001>
module attributes {stable_mosaic.version = 11 : i64} {
  func.func @_resident_kernel(%arg0: i32, %arg1: memref<8x32xf32, #tpu.memory_space<vmem>>, %arg2: memref<8x32xf32, #tpu.memory_space<vmem>>, %arg3: memref<8x1xi32, #tpu.memory_space<vmem>>, %arg4: memref<1x8xi32, #tpu.memory_space<vmem>>, %arg5: memref<8x1xf32, #tpu.memory_space<vmem>>, %arg6: memref<8x1xf32, #tpu.memory_space<vmem>>) attributes {dimension_semantics = [#tpu.dimension_semantics<parallel>], iteration_bounds = array<i64: 1>, scalar_prefetch = 0 : i64, scratch_operands = 0 : i64, tpu.core_type = #tpu.core_type<tc>, window_params = [{transform_indices = @transform_0, window_bounds = array<i64: 8, 32>}, {pipeline_mode = #tpu.pipeline_mode<synchronous>, transform_indices = @transform_1, window_bounds = array<i64: 8, 32>}, {transform_indices = @transform_2, window_bounds = array<i64: 8, 1>}, {pipeline_mode = #tpu.pipeline_mode<synchronous>, transform_indices = @transform_3, window_bounds = array<i64: 1, 8>}, {transform_indices = @transform_4, window_bounds = array<i64: 8, 1>}, {transform_indices = @transform_5, window_bounds = array<i64: 8, 1>}]} {
    %c0 = arith.constant 0 : index
    %c0_0 = arith.constant 0 : index
    %0 = vector.load %arg1[%c0, %c0_0] : memref<8x32xf32, #tpu.memory_space<vmem>>, vector<8x32xf32>
    %c0_1 = arith.constant 0 : index
    %c0_2 = arith.constant 0 : index
    %1 = vector.load %arg2[%c0_1, %c0_2] : memref<8x32xf32, #tpu.memory_space<vmem>>, vector<8x32xf32>
    %cst = arith.constant dense<0.000000e+00> : vector<8x8xf32>
    %2 = tpu.matmul %0, %1, %cst {dimension_numbers = #tpu.dot_dimension_numbers<[1], [1], [0], [0], [0, 0, 1, 0], [], []>} : vector<8x32xf32>, vector<8x32xf32>, vector<8x8xf32> -> vector<8x8xf32>
    %cst_3 = arith.constant 2.000000e+01 : f32
    %3 = vector.broadcast %cst_3 : f32 to vector<8x8xf32>
    %4 = arith.mulf %2, %3 : vector<8x8xf32>
    %c8_i32 = arith.constant 8 : i32
    %5 = arith.muli %arg0, %c8_i32 : i32
    %6 = tpu.iota {dimensions = array<i32: 0>} : vector<8x8xi32>
    %7 = vector.broadcast %5 : i32 to vector<8x8xi32>
    %8 = arith.addi %7, %6 : vector<8x8xi32>
    %9 = tpu.iota {dimensions = array<i32: 1>} : vector<8x8xi32>
    %10 = arith.cmpi ne, %8, %9 : vector<8x8xi32>
    %c0_4 = arith.constant 0 : index
    %c0_5 = arith.constant 0 : index
    %11 = vector.load %arg3[%c0_4, %c0_5] : memref<8x1xi32, #tpu.memory_space<vmem>>, vector<8x1xi32>
    %c0_6 = arith.constant 0 : index
    %c0_7 = arith.constant 0 : index
    %12 = vector.load %arg4[%c0_6, %c0_7] : memref<1x8xi32, #tpu.memory_space<vmem>>, vector<1x8xi32>
    %13 = vector.broadcast %11 : vector<8x1xi32> to vector<8x8xi32>
    %14 = vector.broadcast %12 : vector<1x8xi32> to vector<8x8xi32>
    %15 = arith.cmpi eq, %13, %14 : vector<8x8xi32>
    %16 = arith.andi %10, %15 : vector<8x8xi1>
    %cst_8 = arith.constant -1.000000e+30 : f32
    %17 = vector.broadcast %cst_8 : f32 to vector<8x8xf32>
    %18 = arith.select %10, %4, %17 : vector<8x8xi1>, vector<8x8xf32>
    %cst_9 = arith.constant dense<0xFF800000> : vector<8xf32>
    %19 = vector.multi_reduction <maximumf>, %18, %cst_9 [1] : vector<8x8xf32> to vector<8xf32>
    %20 = vector.shape_cast %19 : vector<8xf32> to vector<8x1xf32>
    %21 = vector.broadcast %20 : vector<8x1xf32> to vector<8x8xf32>
    %22 = arith.subf %18, %21 : vector<8x8xf32>
    %23 = math.exp %22 : vector<8x8xf32>
    %cst_10 = arith.constant 1.000000e+00 : f32
    %24 = vector.broadcast %cst_10 : f32 to vector<8x1xf32>
    %25 = arith.extui %16 : vector<8x8xi1> to vector<8x8xi32>
    %26 = arith.sitofp %25 : vector<8x8xi32> to vector<8x8xf32>
    %cst_11 = arith.constant dense<0.000000e+00> : vector<8x1xf32>
    %27 = tpu.matmul %23, %24, %cst_11 {dimension_numbers = #tpu.dot_dimension_numbers<[1], [0], [0], [1], [0, 0, 1, 1], [], []>} : vector<8x8xf32>, vector<8x1xf32>, vector<8x1xf32> -> vector<8x1xf32>
    %28 = arith.mulf %26, %4 : vector<8x8xf32>
    %cst_12 = arith.constant dense<0.000000e+00> : vector<8x1xf32>
    %29 = tpu.matmul %28, %24, %cst_12 {dimension_numbers = #tpu.dot_dimension_numbers<[1], [0], [0], [1], [0, 0, 1, 1], [], []>} : vector<8x8xf32>, vector<8x1xf32>, vector<8x1xf32> -> vector<8x1xf32>
    %cst_13 = arith.constant dense<0.000000e+00> : vector<8x1xf32>
    %30 = tpu.matmul %26, %24, %cst_13 {dimension_numbers = #tpu.dot_dimension_numbers<[1], [0], [0], [1], [0, 0, 1, 1], [], []>} : vector<8x8xf32>, vector<8x1xf32>, vector<8x1xf32> -> vector<8x1xf32>
    %31 = math.log %27 : vector<8x1xf32>
    %32 = arith.addf %20, %31 : vector<8x1xf32>
    %33 = arith.mulf %30, %32 : vector<8x1xf32>
    %34 = arith.subf %29, %33 : vector<8x1xf32>
    %cst_14 = arith.constant 9.99999996E-13 : f32
    %35 = vector.broadcast %cst_14 : f32 to vector<8x1xf32>
    %36 = arith.addf %30, %35 : vector<8x1xf32>
    %37 = arith.divf %34, %36 : vector<8x1xf32>
    %c0_15 = arith.constant 0 : index
    %c0_16 = arith.constant 0 : index
    %38 = vector.load %arg5[%c0_15, %c0_16] : memref<8x1xf32, #tpu.memory_space<vmem>>, vector<8x1xf32>
    tpu.vector_store %arg5[%c0_15, %c0_16], %37 {strides = array<i32>} : memref<8x1xf32, #tpu.memory_space<vmem>>, vector<8x1xf32>,
    %c0_17 = arith.constant 0 : index
    %c0_18 = arith.constant 0 : index
    %39 = vector.load %arg6[%c0_17, %c0_18] : memref<8x1xf32, #tpu.memory_space<vmem>>, vector<8x1xf32>
    tpu.vector_store %arg6[%c0_17, %c0_18], %30 {strides = array<i32>} : memref<8x1xf32, #tpu.memory_space<vmem>>, vector<8x1xf32>,
    return
  }
  func.func @transform_0(%arg0: i32) -> (i32, i32) {
    %c0_i32 = arith.constant 0 : i32
    %c0_i32_0 = arith.constant 0 : i32
    return %arg0, %c0_i32 : i32, i32
  }
  func.func @transform_1(%arg0: i32) -> (i32, i32) {
    %c0_i32 = arith.constant 0 : i32
    %c0_i32_0 = arith.constant 0 : i32
    %c0_i32_1 = arith.constant 0 : i32
    return %c0_i32, %c0_i32_0 : i32, i32
  }
  func.func @transform_2(%arg0: i32) -> (i32, i32) {
    %c0_i32 = arith.constant 0 : i32
    %c0_i32_0 = arith.constant 0 : i32
    return %arg0, %c0_i32 : i32, i32
  }
  func.func @transform_3(%arg0: i32) -> (i32, i32) {
    %c0_i32 = arith.constant 0 : i32
    %c0_i32_0 = arith.constant 0 : i32
    %c0_i32_1 = arith.constant 0 : i32
    return %c0_i32, %c0_i32_0 : i32, i32
  }
  func.func @transform_4(%arg0: i32) -> (i32, i32) {
    %c0_i32 = arith.constant 0 : i32
    %c0_i32_0 = arith.constant 0 : i32
    return %arg0, %c0_i32 : i32, i32
  }
  func.func @transform_5(%arg0: i32) -> (i32, i32) {
    %c0_i32 = arith.constant 0 : i32
    %c0_i32_0 = arith.constant 0 : i32
    return %arg0, %c0_i32 : i32, i32
  }
}

</mosaic_0001>

<llo_original>
// kernel: tpu_custom_call.1
$region0: #{tpu_custom_call.1}
  #allocation0 [shape = 'u32[]', space=smem, size = 0x4, offset = 0x4, fixed_abs, tag = 'smem constant byte address 0x4 - core index']
  #allocation1 [shape = 'u32[144,128]{1,0:T(1,128)}', space=vmem, size = 0x12000, scoped, tag = 'internal scratch']
  %s0 = inlined_call_operand.vmem [shape: f32[8,32], index: 0, kind: input, shape index: {}]
  %s1 = inlined_call_operand.hbm [shape: f32[8,32], index: 1, kind: input, shape index: {}]
  %s2 = inlined_call_operand.vmem [shape: s32[8,1], index: 2, kind: input, shape index: {}]
  %s3 = inlined_call_operand.vmem [shape: s32[1,8], index: 3, kind: input, shape index: {}]
  %s4 = inlined_call_operand.vmem [shape: f32[8,1], index: 4, kind: output, shape index: {0}]
  %s5 = inlined_call_operand.vmem [shape: f32[8,1], index: 5, kind: output, shape index: {1}]
  %6 = xla_tuple %s4, %s5
  %s7 = sld [smem:[#allocation0]]
  $region38: #{tpu_custom_call.1} parent=0
    _
  %s9 = ssub.s32 1, %s7
  %s10 = scalar_select 0, %s9, %s7
  $region1: #{tpu_custom_call.1} parent=0
    #allocation2 [shape = 'u8[4096]{0}', space=vmem, size = 0x1000, scoped, tag = 'input window, operand 1, single buffered']
    #allocation3 [shape = 's32[1]{0}', space=sflag, size = 0x4, scoped, tag = 'scoped memory for tpu_custom_call.1']
    %11 = vsyncpa [#allocation3], 0
    // Predicated region
    $region2: #{tpu_custom_call.1} parent=1 // pred_check
      _
    $region3: #{tpu_custom_call.1} parent=1 // pred_check_branch
      %13 = sbr.rel (0) target = $region5
    $region4: #{tpu_custom_call.1} parent=1 // pred_region
      _
    $region5: #{tpu_custom_call.1} parent=1 // pred_fallthru
      _
    // Predicated region
    $region6: #{tpu_custom_call.1} parent=1 // pred_check
      _
    $region7: #{tpu_custom_call.1} parent=1 // pred_check_branch
      %15 = sbr.rel (0) target = $region9
    $region8: #{tpu_custom_call.1} parent=1 // pred_region
      %s17 = ssub.s32 128, 128
      %18 = vsyncadd [#allocation3], %s17
      %s20 = sshll.u32 [#allocation2], 4
      %s21 = int_to_ptr.vmem [resolvable:$true] %s20
      %23 = dma.hbm_to_vmem [thread:$0]  %s1, 128, %s21, [#allocation3]
    $region9: #{tpu_custom_call.1} parent=1 // pred_fallthru
      _
    // Predicated region
    $region10: #{tpu_custom_call.1} parent=1 // pred_check
      _
    $region11: #{tpu_custom_call.1} parent=1 // pred_check_branch
      %25 = sbr.rel (0) target = $region13
    $region12: #{tpu_custom_call.1} parent=1 // pred_region
      _
    $region13: #{tpu_custom_call.1} parent=1 // pred_fallthru
      _
    // Predicated region
    $region14: #{tpu_custom_call.1} parent=1 // pred_check
      _
    $region15: #{tpu_custom_call.1} parent=1 // pred_check_branch
      %27 = sbr.rel (0) target = $region17
    $region16: #{tpu_custom_call.1} parent=1 // pred_region
      _
    $region17: #{tpu_custom_call.1} parent=1 // pred_fallthru
      _
    // Predicated region
    $region18: #{tpu_custom_call.1} parent=1 // pred_check
      _
    $region19: #{tpu_custom_call.1} parent=1 // pred_check_branch
      %29 = sbr.rel (0) target = $region21
    $region20: #{tpu_custom_call.1} parent=1 // pred_region
      %30 = dma.done [#allocation3], 128
    $region21: #{tpu_custom_call.1} parent=1 // pred_fallthru
      _
    %v31 = vld [vmem:[%s0] sm:$0xff]
    %v32 = vld [vmem:[#allocation2] sm:$0xff]
    %vm33 = vcmask 261120
    %v35 = vsel %vm33, %v31, 0
    %v38 = vsel %vm33, %v32, 0
    %40 = vmatprep.subr.mxu0 0.0
    %41 = vmatpush1.xpose.msra.mxu0 %v38
    %42 = vmatprep.subr.mxu0 0.0
    %43 = vmatpush1.xpose.msra.mxu0 0.0
    %44 = vmatprep.subr.mxu0 0.0
    %45 = vmatpush1.xpose.msra.mxu0 0.0
    %46 = vmatprep.subr.mxu0 0.0
    %47 = vmatpush1.xpose.msra.mxu0 0.0
    %48 = vmatprep.subr.mxu0 0.0
    %49 = vmatpush1.xpose.msra.mxu0 0.0
    %50 = vmatprep.subr.mxu0 0.0
    %51 = vmatpush1.xpose.msra.mxu0 0.0
    %52 = vmatprep.subr.mxu0 0.0
    %53 = vmatpush1.xpose.msra.mxu0 0.0
    %54 = vmatprep.subr.mxu0 0.0
    %55 = vmatpush1.xpose.msra.mxu0 0.0
    %56 = vmatprep.subr.mxu0 0.0
    %57 = vmatpush1.xpose.msra.mxu0 0.0
    %58 = vmatprep.subr.mxu0 0.0
    %59 = vmatpush1.xpose.msra.mxu0 0.0
    %60 = vmatprep.subr.mxu0 0.0
    %61 = vmatpush1.xpose.msra.mxu0 0.0
    %62 = vmatprep.subr.mxu0 0.0
    %63 = vmatpush1.xpose.msra.mxu0 0.0
    %64 = vmatprep.subr.mxu0 0.0
    %65 = vmatpush1.xpose.msra.mxu0 0.0
    %66 = vmatprep.subr.mxu0 0.0
    %67 = vmatpush1.xpose.msra.mxu0 0.0
    %68 = vmatprep.subr.mxu0 0.0
    %69 = vmatpush1.xpose.msra.mxu0 0.0
    %70 = vmatprep.subr.mxu0 0.0
    %71 = vmatpush1.xpose.msra.mxu0 0.0
    %72 = vmatprep.subr.mxu0 0.0
    %73 = vmatpush1.xpose.msra.mxu0 0.0
    %74 = vmatprep.subr.mxu0 0.0
    %75 = vmatpush1.xpose.msra.mxu0 0.0
    %76 = vmatprep.subr.mxu0 0.0
    %77 = vmatpush1.xpose.msra.mxu0 0.0
    %78 = vmatprep.subr.mxu0 0.0
    %79 = vmatpush1.xpose.msra.mxu0 0.0
    %80 = vmatprep.subr.mxu0 0.0
    %81 = vmatpush1.xpose.msra.mxu0 0.0
    %82 = vmatprep.subr.mxu0 0.0
    %83 = vmatpush1.xpose.msra.mxu0 0.0
    %84 = vmatprep.subr.mxu0 0.0
    %85 = vmatpush1.xpose.msra.mxu0 0.0
    %86 = vmatprep.subr.mxu0 0.0
    %87 = vmatpush1.xpose.msra.mxu0 0.0
    %88 = vmatprep.subr.mxu0 0.0
    %89 = vmatpush1.xpose.msra.mxu0 0.0
    %90 = vmatprep.subr.mxu0 0.0
    %91 = vmatpush1.xpose.msra.mxu0 0.0
    %92 = vmatprep.subr.mxu0 0.0
    %93 = vmatpush1.xpose.msra.mxu0 0.0
    %94 = vmatprep.subr.mxu0 0.0
    %95 = vmatpush1.xpose.msra.mxu0 0.0
    %96 = vmatprep.subr.mxu0 0.0
    %97 = vmatpush1.xpose.msra.mxu0 0.0
    %98 = vmatprep.subr.mxu0 0.0
    %99 = vmatpush1.xpose.msra.mxu0 0.0
    %100 = vmatprep.subr.mxu0 0.0
    %101 = vmatpush1.xpose.msra.mxu0 0.0
    %102 = vmatprep.subr.mxu0 0.0
    %103 = vmatpush1.xpose.msra.mxu0 0.0
    %104 = vmatprep.mubr.f32.mxu0 0.0
    %105 = vmatmul.mubr.f32.gmra.mrb[0].mxu0 %v35
    %v106 = vpop.f32.mrb[0].mxu0
    %v107 = vadd.f32 0.0, %v106
    %v108 = vpop.f32.mrb[0].mxu0
    %109 = vdwg.mxu0
    %v110 = vmul.f32 %v107, 20.0
    %s111 = smul.u32 0, 8
    %v112 = vlaneseq
    %v113 = vshrl.u32 %v112, 7
    %v114 = vstv %s111
    %v115 = vadd.s32 %v114, %v113
    %v116 = vlaneseq
    %v117 = vand.u32 %v116, 127
    %vm118 = vcmp.ne.s32.totalorder %v115, %v117
    %v119 = vld [vmem:[%s2] sm:$0xff]
    %v120 = vld [vmem:[%s3] sm:$0x1]
    %121 = vset.pattern.permute.xlu0 0
    %122 = vperm.xlu0 %121, %v119
    %v123 = vpop.permute.xlu0 %122
    %v124 = vlaneseq
    %v125 = vshrl.u32 %v124, 7
    %v126 = vsub.s32 0, %v125
    %v127 = vrot.slane %v120, %v126
    %vm128 = vcmp.eq.s32.totalorder %v123, %v127
    %vm129 = vmand %vm118, %vm128
    %v130 = vsel %vm118, %v110, -1e+30
    %vm131 = vcmask 64512
    %v132 = vsel %vm131, %v130, -inf
    %133 = vmax.xlane.f32.xlu0 %v132
    %v134 = vpop.xlane.xlu0 %133
    %v135 = vsub.f32 %v130, %v134
    %v136 = vmul.f32 %v135, 1.442695
    %v137 = vpow.pop %v136
    %v138 = vsel %vm129, 1, 0
    %v139 = vcvt.s32.f32 %v138
    %v141 = vsel %vm131, %v137, 0
    %143 = vmatprep.subr.mxu0 0.0
    %144 = vmatpush1.msra.mxu0 1.0
    %145 = vmatprep.subr.mxu0 0.0
    %146 = vmatpush1.msra.mxu0 0.0
    %147 = vmatprep.subr.mxu0 0.0
    %148 = vmatpush1.msra.mxu0 0.0
    %149 = vmatprep.subr.mxu0 0.0
    %150 = vmatpush1.msra.mxu0 0.0
    %151 = vmatprep.subr.mxu0 0.0
    %152 = vmatpush1.msra.mxu0 0.0
    %153 = vmatprep.subr.mxu0 0.0
    %154 = vmatpush1.msra.mxu0 0.0
    %155 = vmatprep.subr.mxu0 0.0
    %156 = vmatpush1.msra.mxu0 0.0
    %157 = vmatprep.subr.mxu0 0.0
    %158 = vmatpush1.msra.mxu0 0.0
    %159 = vmatprep.subr.mxu0 0.0
    %160 = vmatpush1.msra.mxu0 0.0
    %161 = vmatprep.subr.mxu0 0.0
    %162 = vmatpush1.msra.mxu0 0.0
    %163 = vmatprep.subr.mxu0 0.0
    %164 = vmatpush1.msra.mxu0 0.0
    %165 = vmatprep.subr.mxu0 0.0
    %166 = vmatpush1.msra.mxu0 0.0
    %167 = vmatprep.subr.mxu0 0.0
    %168 = vmatpush1.msra.mxu0 0.0
    %169 = vmatprep.subr.mxu0 0.0
    %170 = vmatpush1.msra.mxu0 0.0
    %171 = vmatprep.subr.mxu0 0.0
    %172 = vmatpush1.msra.mxu0 0.0
    %173 = vmatprep.subr.mxu0 0.0
    %174 = vmatpush1.msra.mxu0 0.0
    %175 = vmatprep.subr.mxu0 0.0
    %176 = vmatpush1.msra.mxu0 0.0
    %177 = vmatprep.subr.mxu0 0.0
    %178 = vmatpush1.msra.mxu0 0.0
    %179 = vmatprep.subr.mxu0 0.0
    %180 = vmatpush1.msra.mxu0 0.0
    %181 = vmatprep.subr.mxu0 0.0
    %182 = vmatpush1.msra.mxu0 0.0
    %183 = vmatprep.subr.mxu0 0.0
    %184 = vmatpush1.msra.mxu0 0.0
    %185 = vmatprep.subr.mxu0 0.0
    %186 = vmatpush1.msra.mxu0 0.0
    %187 = vmatprep.subr.mxu0 0.0
    %188 = vmatpush1.msra.mxu0 0.0
    %189 = vmatprep.subr.mxu0 0.0
    %190 = vmatpush1.msra.mxu0 0.0
    %191 = vmatprep.subr.mxu0 0.0
    %192 = vmatpush1.msra.mxu0 0.0
    %193 = vmatprep.subr.mxu0 0.0
    %194 = vmatpush1.msra.mxu0 0.0
    %195 = vmatprep.subr.mxu0 0.0
    %196 = vmatpush1.msra.mxu0 0.0
    %197 = vmatprep.subr.mxu0 0.0
    %198 = vmatpush1.msra.mxu0 0.0
    %199 = vmatprep.subr.mxu0 0.0
    %200 = vmatpush1.msra.mxu0 0.0
    %201 = vmatprep.subr.mxu0 0.0
    %202 = vmatpush1.msra.mxu0 0.0
    %203 = vmatprep.subr.mxu0 0.0
    %204 = vmatpush1.msra.mxu0 0.0
    %205 = vmatprep.subr.mxu0 0.0
    %206 = vmatpush1.msra.mxu0 0.0
    %207 = vmatprep.mubr.f32.mxu0 0.0
    %208 = vmatmul.mubr.f32.gmra.mrb[0].mxu0 %v141
    %v209 = vpop.f32.mrb[0].mxu0
    %v210 = vadd.f32 0.0, %v209
    %v211 = vpop.f32.mrb[0].mxu0
    %212 = vdwg.mxu0
    %v213 = vmul.f32 %v139, %v110
    %v215 = vsel %vm131, %v213, 0
    %217 = vmatprep.subr.mxu0 0.0
    %218 = vmatpush1.msra.mxu0 1.0
    %219 = vmatprep.subr.mxu0 0.0
    %220 = vmatpush1.msra.mxu0 0.0
    %221 = vmatprep.subr.mxu0 0.0
    %222 = vmatpush1.msra.mxu0 0.0
    %223 = vmatprep.subr.mxu0 0.0
    %224 = vmatpush1.msra.mxu0 0.0
    %225 = vmatprep.subr.mxu0 0.0
    %226 = vmatpush1.msra.mxu0 0.0
    %227 = vmatprep.subr.mxu0 0.0
    %228 = vmatpush1.msra.mxu0 0.0
    %229 = vmatprep.subr.mxu0 0.0
    %230 = vmatpush1.msra.mxu0 0.0
    %231 = vmatprep.subr.mxu0 0.0
    %232 = vmatpush1.msra.mxu0 0.0
    %233 = vmatprep.subr.mxu0 0.0
    %234 = vmatpush1.msra.mxu0 0.0
    %235 = vmatprep.subr.mxu0 0.0
    %236 = vmatpush1.msra.mxu0 0.0
    %237 = vmatprep.subr.mxu0 0.0
    %238 = vmatpush1.msra.mxu0 0.0
    %239 = vmatprep.subr.mxu0 0.0
    %240 = vmatpush1.msra.mxu0 0.0
    %241 = vmatprep.subr.mxu0 0.0
    %242 = vmatpush1.msra.mxu0 0.0
    %243 = vmatprep.subr.mxu0 0.0
    %244 = vmatpush1.msra.mxu0 0.0
    %245 = vmatprep.subr.mxu0 0.0
    %246 = vmatpush1.msra.mxu0 0.0
    %247 = vmatprep.subr.mxu0 0.0
    %248 = vmatpush1.msra.mxu0 0.0
    %249 = vmatprep.subr.mxu0 0.0
    %250 = vmatpush1.msra.mxu0 0.0
    %251 = vmatprep.subr.mxu0 0.0
    %252 = vmatpush1.msra.mxu0 0.0
    %253 = vmatprep.subr.mxu0 0.0
    %254 = vmatpush1.msra.mxu0 0.0
    %255 = vmatprep.subr.mxu0 0.0
    %256 = vmatpush1.msra.mxu0 0.0
    %257 = vmatprep.subr.mxu0 0.0
    %258 = vmatpush1.msra.mxu0 0.0
    %259 = vmatprep.subr.mxu0 0.0
    %260 = vmatpush1.msra.mxu0 0.0
    %261 = vmatprep.subr.mxu0 0.0
    %262 = vmatpush1.msra.mxu0 0.0
    %263 = vmatprep.subr.mxu0 0.0
    %264 = vmatpush1.msra.mxu0 0.0
    %265 = vmatprep.subr.mxu0 0.0
    %266 = vmatpush1.msra.mxu0 0.0
    %267 = vmatprep.subr.mxu0 0.0
    %268 = vmatpush1.msra.mxu0 0.0
    %269 = vmatprep.subr.mxu0 0.0
    %270 = vmatpush1.msra.mxu0 0.0
    %271 = vmatprep.subr.mxu0 0.0
    %272 = vmatpush1.msra.mxu0 0.0
    %273 = vmatprep.subr.mxu0 0.0
    %274 = vmatpush1.msra.mxu0 0.0
    %275 = vmatprep.subr.mxu0 0.0
    %276 = vmatpush1.msra.mxu0 0.0
    %277 = vmatprep.subr.mxu0 0.0
    %278 = vmatpush1.msra.mxu0 0.0
    %279 = vmatprep.subr.mxu0 0.0
    %280 = vmatpush1.msra.mxu0 0.0
    %281 = vmatprep.mubr.f32.mxu0 0.0
    %282 = vmatmul.mubr.f32.gmra.mrb[0].mxu0 %v215
    %v283 = vpop.f32.mrb[0].mxu0
    %v284 = vadd.f32 0.0, %v283
    %v285 = vpop.f32.mrb[0].mxu0
    %286 = vdwg.mxu0
    %v288 = vsel %vm131, %v139, 0
    %290 = vmatprep.subr.mxu0 0.0
    %291 = vmatpush1.msra.mxu0 1.0
    %292 = vmatprep.subr.mxu0 0.0
    %293 = vmatpush1.msra.mxu0 0.0
    %294 = vmatprep.subr.mxu0 0.0
    %295 = vmatpush1.msra.mxu0 0.0
    %296 = vmatprep.subr.mxu0 0.0
    %297 = vmatpush1.msra.mxu0 0.0
    %298 = vmatprep.subr.mxu0 0.0
    %299 = vmatpush1.msra.mxu0 0.0
    %300 = vmatprep.subr.mxu0 0.0
    %301 = vmatpush1.msra.mxu0 0.0
    %302 = vmatprep.subr.mxu0 0.0
    %303 = vmatpush1.msra.mxu0 0.0
    %304 = vmatprep.subr.mxu0 0.0
    %305 = vmatpush1.msra.mxu0 0.0
    %306 = vmatprep.subr.mxu0 0.0
    %307 = vmatpush1.msra.mxu0 0.0
    %308 = vmatprep.subr.mxu0 0.0
    %309 = vmatpush1.msra.mxu0 0.0
    %310 = vmatprep.subr.mxu0 0.0
    %311 = vmatpush1.msra.mxu0 0.0
    %312 = vmatprep.subr.mxu0 0.0
    %313 = vmatpush1.msra.mxu0 0.0
    %314 = vmatprep.subr.mxu0 0.0
    %315 = vmatpush1.msra.mxu0 0.0
    %316 = vmatprep.subr.mxu0 0.0
    %317 = vmatpush1.msra.mxu0 0.0
    %318 = vmatprep.subr.mxu0 0.0
    %319 = vmatpush1.msra.mxu0 0.0
    %320 = vmatprep.subr.mxu0 0.0
    %321 = vmatpush1.msra.mxu0 0.0
    %322 = vmatprep.subr.mxu0 0.0
    %323 = vmatpush1.msra.mxu0 0.0
    %324 = vmatprep.subr.mxu0 0.0
    %325 = vmatpush1.msra.mxu0 0.0
    %326 = vmatprep.subr.mxu0 0.0
    %327 = vmatpush1.msra.mxu0 0.0
    %328 = vmatprep.subr.mxu0 0.0
    %329 = vmatpush1.msra.mxu0 0.0
    %330 = vmatprep.subr.mxu0 0.0
    %331 = vmatpush1.msra.mxu0 0.0
    %332 = vmatprep.subr.mxu0 0.0
    %333 = vmatpush1.msra.mxu0 0.0
    %334 = vmatprep.subr.mxu0 0.0
    %335 = vmatpush1.msra.mxu0 0.0
    %336 = vmatprep.subr.mxu0 0.0
    %337 = vmatpush1.msra.mxu0 0.0
    %338 = vmatprep.subr.mxu0 0.0
    %339 = vmatpush1.msra.mxu0 0.0
    %340 = vmatprep.subr.mxu0 0.0
    %341 = vmatpush1.msra.mxu0 0.0
    %342 = vmatprep.subr.mxu0 0.0
    %343 = vmatpush1.msra.mxu0 0.0
    %344 = vmatprep.subr.mxu0 0.0
    %345 = vmatpush1.msra.mxu0 0.0
    %346 = vmatprep.subr.mxu0 0.0
    %347 = vmatpush1.msra.mxu0 0.0
    %348 = vmatprep.subr.mxu0 0.0
    %349 = vmatpush1.msra.mxu0 0.0
    %350 = vmatprep.subr.mxu0 0.0
    %351 = vmatpush1.msra.mxu0 0.0
    %352 = vmatprep.subr.mxu0 0.0
    %353 = vmatpush1.msra.mxu0 0.0
    %354 = vmatprep.mubr.f32.mxu0 0.0
    %355 = vmatmul.mubr.f32.gmra.mrb[0].mxu0 %v288
    %v356 = vpop.f32.mrb[0].mxu0
    %v357 = vadd.f32 0.0, %v356
    %v358 = vpop.f32.mrb[0].mxu0
    %359 = vdwg.mxu0
    %v360 = vlog2.pop %v210
    %v361 = vmul.f32 %v360, 0.6931472
    %v362 = vadd.f32 %v134, %v361
    %v363 = vmul.f32 %v357, %v362
    %v364 = vsub.f32 %v284, %v363
    %v365 = vadd.f32 %v357, 1e-12
    %v366 = vrcp.pop %v365
    %v367 = vmul.f32 %v364, %v366
    %vm368 = vcmask 7168
    %369 = vst.msk [vmem:[%s4] sm:$0xff] %vm368, %v367
    %370 = vst.msk [vmem:[%s5] sm:$0xff] %vm368, %v357
    // Predicated region
    $region22: #{tpu_custom_call.1} parent=1 // pred_check
      _
    $region23: #{tpu_custom_call.1} parent=1 // pred_check_branch
      %372 = sbr.rel (0) target = $region25
    $region24: #{tpu_custom_call.1} parent=1 // pred_region
      _
    $region25: #{tpu_custom_call.1} parent=1 // pred_fallthru
      _
    // Predicated region
    $region26: #{tpu_custom_call.1} parent=1 // pred_check
      _
    $region27: #{tpu_custom_call.1} parent=1 // pred_check_branch
      %374 = sbr.rel (0) target = $region29
    $region28: #{tpu_custom_call.1} parent=1 // pred_region
      _
    $region29: #{tpu_custom_call.1} parent=1 // pred_fallthru
      _
    // Predicated region
    $region30: #{tpu_custom_call.1} parent=1 // pred_check
      _
    $region31: #{tpu_custom_call.1} parent=1 // pred_check_branch
      %376 = sbr.rel (0) target = $region33
    $region32: #{tpu_custom_call.1} parent=1 // pred_region
      _
    $region33: #{tpu_custom_call.1} parent=1 // pred_fallthru
      _
    // Predicated region
    $region34: #{tpu_custom_call.1} parent=1 // pred_check
      _
    $region35: #{tpu_custom_call.1} parent=1 // pred_check_branch
      %378 = sbr.rel (0) target = $region37
    $region36: #{tpu_custom_call.1} parent=1 // pred_region
      _
    $region37: #{tpu_custom_call.1} parent=1 // pred_fallthru
      _
    %379 = vsyncpa [#allocation3], 1

</llo_original>
